<compile_context>
chip_gen: v7x
topology: tpu7x:2x2x1
jax: 0.10.0
libtpu: 0.0.40
codegen_flags: <defaults>
</compile_context>

<pallas_src>
import jax
import jax.numpy as jnp
from jax.experimental import pallas as pl
from jax.experimental.pallas import tpu as pltpu

EPS = 1e-5


def layernorm_kernel(x_ref, p_ref, o_ref):
    """x_ref: (rows, D); p_ref: (2, D) packed [scale; shift]; o_ref: (rows, D)."""
    x = x_ref[...]                              # (rows, D) f32
    scale = p_ref[0:1, :]                       # (1, D) -> broadcasts over rows
    shift = p_ref[1:2, :]

    mean = jnp.mean(x, axis=-1, keepdims=True)          # matches torch .mean
    centered = x - mean
    var = jnp.mean(centered * centered, axis=-1, keepdims=True)  # biased (unbiased=False)
    inv_std = jax.lax.rsqrt(var + EPS)                  # EUP rsqrt, no VALU divide
    o_ref[...] = scale * (centered * inv_std) + shift


def layernorm(x, scale, shift, *, max_row_block=512):
    """LayerNorm over the last dim of x (any leading shape), Pallas TPU kernel."""
    orig_shape = x.shape
    D = orig_shape[-1]
    x2 = x.reshape(-1, D)                       # flatten leading dims: (N, D)
    N = x2.shape[0]

    # Packed parameter slab: one operand instead of two tiny ones.
    params = jnp.stack([scale.reshape(D), shift.reshape(D)], axis=0)  # (2, D)

    # Collapse the grid whenever the whole slab fits in one block; otherwise
    # tile rows (row block must divide N and stay a multiple of 8 sublanes).
    if N <= max_row_block:
        row_block = N
    else:
        row_block = max_row_block
        while N % row_block != 0:
            row_block -= 8
        row_block = max(row_block, 8)
    grid = (N // row_block,)

    out2 = pl.pallas_call(
        layernorm_kernel,
        out_shape=jax.ShapeDtypeStruct((N, D), x.dtype),
        grid=grid,
        in_specs=[
            pl.BlockSpec((row_block, D), lambda i: (i, 0)),   # activation rows
            pl.BlockSpec((2, D), lambda i: (0, 0)),           # packed scale/shift
        ],
        out_specs=pl.BlockSpec((row_block, D), lambda i: (i, 0)),
        compiler_params=pltpu.CompilerParams(
            dimension_semantics=("parallel",),                # shards across TCs on v7x
        ),
    )(x2, params)
    return out2.reshape(orig_shape)


# ---- pure-JAX reference (mirrors the PyTorch LayerNorm.forward) ----
def reference(x, scale, shift):
    mean = jnp.mean(x, axis=-1, keepdims=True)
    var = jnp.mean((x - mean) ** 2, axis=-1, keepdims=True)   # unbiased=False
    norm_x = (x - mean) / jnp.sqrt(var + EPS)
    return scale * norm_x + shift


if __name__ == "__main__":
    # Small shapes consistent with the module: batch=2, seq=8, emb_dim=32.
    B, T, D = 2, 8, 32
    key = jax.random.PRNGKey(0)
    kx, ks, kb = jax.random.split(key, 3)

    x = jax.random.normal(kx, (B, T, D), jnp.float32)
    # Non-trivial affine params (PyTorch init is ones/zeros; perturb to
    # actually exercise the scale/shift path).
    scale = 1.0 + 0.1 * jax.random.normal(ks, (D,), jnp.float32)
    shift = 0.1 * jax.random.normal(kb, (D,), jnp.float32)

    out = layernorm(x, scale, shift)
    out = jax.block_until_ready(out)

    ref = reference(x, scale, shift)
    assert out.shape == (B, T, D)
    assert jnp.allclose(out, ref, atol=1e-4, rtol=1e-4), "mismatch vs reference"
    print("KERNEL_OK")
</pallas_src>

<mosaic_0001>
module attributes {stable_mosaic.version = 11 : i64} {
  func.func @layernorm_kernel(%arg0: i32, %arg1: memref<16x32xf32, #tpu.memory_space<vmem>>, %arg2: memref<2x32xf32, #tpu.memory_space<vmem>>, %arg3: memref<16x32xf32, #tpu.memory_space<vmem>>) attributes {dimension_semantics = [#tpu.dimension_semantics<parallel>], iteration_bounds = array<i64: 1>, scalar_prefetch = 0 : i64, scratch_operands = 0 : i64, tpu.core_type = #tpu.core_type<tc>, window_params = [{transform_indices = @transform_0, window_bounds = array<i64: 16, 32>}, {pipeline_mode = #tpu.pipeline_mode<synchronous>, transform_indices = @transform_1, window_bounds = array<i64: 2, 32>}, {transform_indices = @transform_2, window_bounds = array<i64: 16, 32>}]} {
    %c0 = arith.constant 0 : index
    %c0_0 = arith.constant 0 : index
    %0 = vector.load %arg1[%c0, %c0_0] : memref<16x32xf32, #tpu.memory_space<vmem>>, vector<16x32xf32>
    %c0_1 = arith.constant 0 : index
    %c0_2 = arith.constant 0 : index
    %1 = vector.load %arg2[%c0_1, %c0_2] : memref<2x32xf32, #tpu.memory_space<vmem>>, vector<1x32xf32>
    %c1 = arith.constant 1 : index
    %c0_3 = arith.constant 0 : index
    %2 = vector.load %arg2[%c1, %c0_3] : memref<2x32xf32, #tpu.memory_space<vmem>>, vector<1x32xf32>
    %cst = arith.constant dense<0.000000e+00> : vector<16xf32>
    %3 = vector.multi_reduction <add>, %0, %cst [1] : vector<16x32xf32> to vector<16xf32>
    %4 = vector.shape_cast %3 : vector<16xf32> to vector<16x1xf32>
    %cst_4 = arith.constant 3.200000e+01 : f32
    %5 = vector.broadcast %cst_4 : f32 to vector<16x1xf32>
    %6 = arith.divf %4, %5 : vector<16x1xf32>
    %7 = vector.broadcast %6 : vector<16x1xf32> to vector<16x32xf32>
    %8 = arith.subf %0, %7 : vector<16x32xf32>
    %9 = arith.mulf %8, %8 : vector<16x32xf32>
    %cst_5 = arith.constant dense<0.000000e+00> : vector<16xf32>
    %10 = vector.multi_reduction <add>, %9, %cst_5 [1] : vector<16x32xf32> to vector<16xf32>
    %11 = vector.shape_cast %10 : vector<16xf32> to vector<16x1xf32>
    %cst_6 = arith.constant 3.200000e+01 : f32
    %12 = vector.broadcast %cst_6 : f32 to vector<16x1xf32>
    %13 = arith.divf %11, %12 : vector<16x1xf32>
    %cst_7 = arith.constant 9.99999974E-6 : f32
    %14 = vector.broadcast %cst_7 : f32 to vector<16x1xf32>
    %15 = arith.addf %13, %14 : vector<16x1xf32>
    %16 = math.rsqrt %15 : vector<16x1xf32>
    %17 = vector.broadcast %16 : vector<16x1xf32> to vector<16x32xf32>
    %18 = arith.mulf %8, %17 : vector<16x32xf32>
    %19 = vector.broadcast %1 : vector<1x32xf32> to vector<16x32xf32>
    %20 = arith.mulf %19, %18 : vector<16x32xf32>
    %21 = vector.broadcast %2 : vector<1x32xf32> to vector<16x32xf32>
    %22 = arith.addf %20, %21 : vector<16x32xf32>
    %c0_8 = arith.constant 0 : index
    %c0_9 = arith.constant 0 : index
    %23 = vector.load %arg3[%c0_8, %c0_9] : memref<16x32xf32, #tpu.memory_space<vmem>>, vector<16x32xf32>
    tpu.vector_store %arg3[%c0_8, %c0_9], %22 {strides = array<i32>} : memref<16x32xf32, #tpu.memory_space<vmem>>, vector<16x32xf32>,
    return
  }
  func.func @transform_0(%arg0: i32) -> (i32, i32) {
    %c0_i32 = arith.constant 0 : i32
    %c0_i32_0 = arith.constant 0 : i32
    return %arg0, %c0_i32 : i32, i32
  }
  func.func @transform_1(%arg0: i32) -> (i32, i32) {
    %c0_i32 = arith.constant 0 : i32
    %c0_i32_0 = arith.constant 0 : i32
    %c0_i32_1 = arith.constant 0 : i32
    return %c0_i32, %c0_i32_0 : i32, i32
  }
  func.func @transform_2(%arg0: i32) -> (i32, i32) {
    %c0_i32 = arith.constant 0 : i32
    %c0_i32_0 = arith.constant 0 : i32
    return %arg0, %c0_i32 : i32, i32
  }
}

</mosaic_0001>

<llo_original>
// kernel: tpu_custom_call.1
$region0: #{tpu_custom_call.1}
  #allocation0 [shape = 'u32[]', space=smem, size = 0x4, offset = 0x4, fixed_abs, tag = 'smem constant byte address 0x4 - core index']
  #allocation1 [shape = 'u32[144,128]{1,0:T(1,128)}', space=vmem, size = 0x12000, scoped, tag = 'internal scratch']
  %s0 = inlined_call_operand.hbm [shape: f32[16,32], index: 0, kind: input, shape index: {}]
  %s1 = inlined_call_operand.vmem [shape: f32[2,32], index: 1, kind: input, shape index: {}]
  %s2 = inlined_call_operand.hbm [shape: f32[16,32], index: 2, kind: output, shape index: {}]
  %s3 = sld [smem:[#allocation0]]
  $region22: #{tpu_custom_call.1} parent=0
    _
  %s5 = ssub.s32 1, %s3
  %s6 = scalar_select 0, %s5, %s3
  $region1: #{tpu_custom_call.1} parent=0
    #allocation2 [shape = 'u8[8192]{0}', space=vmem, size = 0x2000, scoped, tag = 'input window, operand 0, single buffered']
    #allocation3 [shape = 's32[1]{0}', space=sflag, size = 0x4, scoped, tag = 'scoped memory for tpu_custom_call.1']
    #allocation4 [shape = 's32[1]{0}', space=sflag, size = 0x4, scoped, tag = 'scoped memory for tpu_custom_call.1']
    #allocation5 [shape = 'u8[8192]{0}', space=vmem, size = 0x2000, scoped, tag = 'output window, operand 0, single buffered']
    %7 = vsyncpa [#allocation3], 0
    %8 = vsyncpa [#allocation4], 0
    // Predicated region
    $region2: #{tpu_custom_call.1} parent=1 // pred_check
      _
    $region3: #{tpu_custom_call.1} parent=1 // pred_check_branch
      %10 = sbr.rel (0) target = $region5
    $region4: #{tpu_custom_call.1} parent=1 // pred_region
      %s12 = ssub.s32 256, 256
      %13 = vsyncadd [#allocation3], %s12
      %s14 = sshll.u32 [#allocation2], 4
      %s15 = int_to_ptr.vmem [resolvable:$true] %s14
      %20 = dma.hbm_to_vmem [thread:$0]  %s0, 256, %s15, [#allocation3], 128, 128, 8
    $region5: #{tpu_custom_call.1} parent=1 // pred_fallthru
      _
    // Predicated region
    $region6: #{tpu_custom_call.1} parent=1 // pred_check
      _
    $region7: #{tpu_custom_call.1} parent=1 // pred_check_branch
      %22 = sbr.rel (0) target = $region9
    $region8: #{tpu_custom_call.1} parent=1 // pred_region
      _
    $region9: #{tpu_custom_call.1} parent=1 // pred_fallthru
      _
    // Predicated region
    $region10: #{tpu_custom_call.1} parent=1 // pred_check
      _
    $region11: #{tpu_custom_call.1} parent=1 // pred_check_branch
      %24 = sbr.rel (0) target = $region13
    $region12: #{tpu_custom_call.1} parent=1 // pred_region
      %25 = dma.done [#allocation3], 256
    $region13: #{tpu_custom_call.1} parent=1 // pred_fallthru
      _
    %v26 = vld [vmem:[#allocation2] sm:$0xff]
    %v27 = vld [vmem:[#allocation2 + $0x8] sm:$0xff]
    %v28 = vld [vmem:[%s1] sm:$0x1]
    %v29 = vld [vmem:[%s1 + $0x1] sm:$0x1]
    %vm30 = vcmask 261120
    %v31 = vsel %vm30, %v26, 0.0
    %32 = vadd.xlane.f32.xlu0 %v31
    %v33 = vpop.xlane.xlu0 %32
    %v34 = vsel %vm30, %v27, 0.0
    %35 = vadd.xlane.f32.xlu0 %v34
    %v36 = vpop.xlane.xlu0 %35
    %v37 = vrcp.pop 32.0
    %v38 = vmul.f32 %v33, %v37
    %v39 = vmul.f32 %v36, %v37
    %v40 = vsub.f32 %v26, %v38
    %v41 = vsub.f32 %v27, %v39
    %v42 = vmul.f32 %v40, %v40
    %v43 = vmul.f32 %v41, %v41
    %v44 = vsel %vm30, %v42, 0.0
    %45 = vadd.xlane.f32.xlu0 %v44
    %v46 = vpop.xlane.xlu0 %45
    %v47 = vsel %vm30, %v43, 0.0
    %48 = vadd.xlane.f32.xlu0 %v47
    %v49 = vpop.xlane.xlu0 %48
    %v50 = vmul.f32 %v46, %v37
    %v51 = vmul.f32 %v49, %v37
    %v52 = vadd.f32 %v50, 1e-05
    %v53 = vadd.f32 %v51, 1e-05
    %v54 = vrsqrt.pop %v52
    %v55 = vrsqrt.pop %v53
    %v56 = vmul.f32 %v40, %v54
    %v57 = vmul.f32 %v41, %v55
    %v58 = vlaneseq
    %v59 = vshrl.u32 %v58, 7
    %v60 = vsub.s32 0, %v59
    %v61 = vrot.slane %v28, %v60
    %v62 = vmul.f32 %v61, %v56
    %v63 = vmul.f32 %v61, %v57
    %v64 = vlaneseq
    %v65 = vshrl.u32 %v64, 7
    %v66 = vsub.s32 0, %v65
    %v67 = vrot.slane %v29, %v66
    %v68 = vadd.f32 %v62, %v67
    %v69 = vadd.f32 %v63, %v67
    %70 = vst.msk [vmem:[#allocation5] sm:$0xff] %vm30, %v68
    %71 = vst.msk [vmem:[#allocation5 + $0x8] sm:$0xff] %vm30, %v69
    // Predicated region
    $region14: #{tpu_custom_call.1} parent=1 // pred_check
      _
    $region15: #{tpu_custom_call.1} parent=1 // pred_check_branch
      %73 = sbr.rel (0) target = $region17
    $region16: #{tpu_custom_call.1} parent=1 // pred_region
      %s75 = ssub.s32 256, 256
      %76 = vsyncadd [#allocation4], %s75
      %s77 = sshll.u32 [#allocation5], 4
      %s78 = int_to_ptr.vmem [resolvable:$true] %s77
      %83 = dma.vmem_to_hbm [thread:$0]  %s78, 256, %s2, [#allocation4], 128, 128, 8
    $region17: #{tpu_custom_call.1} parent=1 // pred_fallthru
      _
    // Predicated region
    $region18: #{tpu_custom_call.1} parent=1 // pred_check
      _
    $region19: #{tpu_custom_call.1} parent=1 // pred_check_branch
      %85 = sbr.rel (0) target = $region21
    $region20: #{tpu_custom_call.1} parent=1 // pred_region
      %86 = dma.done [#allocation4], 256
    $region21: #{tpu_custom_call.1} parent=1 // pred_fallthru
      _
    %87 = vsyncpa [#allocation3], 1
    %88 = vsyncpa [#allocation4], 1

</llo_original>
